<compile_context>
chip_gen: v6e
topology: v6e:2x2x1
jax: 0.10.0
libtpu: 0.0.40
codegen_flags: <defaults>
</compile_context>

<pallas_src>
import math

import jax
import jax.numpy as jnp
from jax.experimental import pallas as pl
from jax.experimental.pallas import tpu as pltpu


def _round_up(x, m):
    return ((x + m - 1) // m) * m


# ----------------------------------------------------------------------------
# Pallas kernels: fused (row tile) matmul + bias, optionally with an input add
# ----------------------------------------------------------------------------
def _linear_kernel(a_ref, w_ref, b_ref, o_ref):
    acc = jnp.dot(a_ref[...], w_ref[...], preferred_element_type=jnp.float32)
    o_ref[...] = acc + b_ref[...]


def _linear_add_kernel(a_ref, t_ref, w_ref, b_ref, o_ref):
    s = a_ref[...] + t_ref[...]                      # fused elementwise add (VPU)
    acc = jnp.dot(s, w_ref[...], preferred_element_type=jnp.float32)
    o_ref[...] = acc + b_ref[...]


def _fused_linear(a2d, w_kd, bias, t2d=None, *, max_tm=1024):
    """Compute (a2d [+ t2d]) @ w_kd + bias with a Pallas TPU kernel.

    a2d : (M, K) f32    t2d : optional (M, K) f32 added before the matmul
    w_kd: (K, N) f32    bias: (N,) f32
    returns (M, N) f32
    """
    M, K = a2d.shape
    N = w_kd.shape[1]

    # Lane-dense output: pad channel axis to a multiple of 128 (unmasked vst).
    n_pad = _round_up(max(N, 128), 128)
    # Large row tile: whole problem for small M (single grid step), capped at max_tm.
    tm = min(max_tm, _round_up(M, 8))
    m_pad = _round_up(M, tm)

    a_p = jnp.pad(a2d, ((0, m_pad - M), (0, 0)))
    w_p = jnp.pad(w_kd, ((0, 0), (0, n_pad - N)))
    b_p = jnp.pad(bias.reshape(1, N), ((0, 0), (0, n_pad - N)))

    row_spec = pl.BlockSpec((tm, K), lambda i: (i, 0))
    w_spec = pl.BlockSpec((K, n_pad), lambda i: (0, 0))
    b_spec = pl.BlockSpec((1, n_pad), lambda i: (0, 0))
    out_spec = pl.BlockSpec((tm, n_pad), lambda i: (i, 0))

    if t2d is None:
        kernel = _linear_kernel
        in_specs = [row_spec, w_spec, b_spec]
        args = (a_p, w_p, b_p)
    else:
        t_p = jnp.pad(t2d, ((0, m_pad - M), (0, 0)))
        kernel = _linear_add_kernel
        in_specs = [row_spec, row_spec, w_spec, b_spec]
        args = (a_p, t_p, w_p, b_p)

    out = pl.pallas_call(
        kernel,
        out_shape=jax.ShapeDtypeStruct((m_pad, n_pad), jnp.float32),
        grid_spec=pltpu.PrefetchScalarGridSpec(
            num_scalar_prefetch=0,
            grid=(m_pad // tm,),
            in_specs=in_specs,
            out_specs=out_spec,
        ),
        compiler_params=pltpu.CompilerParams(
            dimension_semantics=("parallel",)),
    )(*args)

    return out[:M, :N]


# ----------------------------------------------------------------------------
# FixedEmbedding / TemporalEmbedding (fixed sinusoidal tables, freq='h') — glue
# ----------------------------------------------------------------------------
def _fixed_embedding_table(c_in, d_model):
    position = jnp.arange(c_in, dtype=jnp.float32)[:, None]
    div_term = jnp.exp(jnp.arange(0, d_model, 2, dtype=jnp.float32)
                       * (-math.log(10000.0) / d_model))
    w = jnp.zeros((c_in, d_model), dtype=jnp.float32)
    w = w.at[:, 0::2].set(jnp.sin(position * div_term))
    w = w.at[:, 1::2].set(jnp.cos(position * div_term))
    return w


def _temporal_embedding_fixed(x_mark, d_model):
    """TemporalEmbedding(embed_type='fixed', freq='h'): sum of 4 fixed lookups.

    x_mark: (B, L, >=4) with columns [month, day, weekday, hour]; returns (B, L, d_model).
    """
    xm = x_mark.astype(jnp.int32)
    hour_x = jnp.take(_fixed_embedding_table(24, d_model), xm[:, :, 3], axis=0)
    weekday_x = jnp.take(_fixed_embedding_table(7, d_model), xm[:, :, 2], axis=0)
    day_x = jnp.take(_fixed_embedding_table(32, d_model), xm[:, :, 1], axis=0)
    month_x = jnp.take(_fixed_embedding_table(13, d_model), xm[:, :, 0], axis=0)
    return hour_x + weekday_x + day_x + month_x   # minute_x == 0.0 for freq='h'


# ----------------------------------------------------------------------------
# DataEmbedding_inverted forward
# ----------------------------------------------------------------------------
def data_embedding_inverted(x, w_value, b_value, x_mark=None):
    """
    x       : (B, R, c_in) f32
    w_value : (d_model, c_in) f32  (torch nn.Linear weight layout)
    b_value : (d_model,) f32
    x_mark  : optional (B, L, >=4) time-mark indices (fixed temporal embedding)
    """
    d_model, _c_in = w_value.shape
    w_kd = w_value.T                                   # (c_in, d_model)

    if x_mark is None:
        B, R, K = x.shape
        out = _fused_linear(x.reshape(B * R, K), w_kd, b_value)
        return out.reshape(B, R, d_model)

    temporal = _temporal_embedding_fixed(x_mark, d_model)      # (B, L, d_model)
    t_perm = jnp.transpose(temporal, (0, 2, 1))                # (B, d_model, L)
    bshape = jnp.broadcast_shapes(x.shape, t_perm.shape)
    x_b = jnp.broadcast_to(x, bshape)
    t_b = jnp.broadcast_to(t_perm, bshape)
    B, R, K = bshape
    out = _fused_linear(x_b.reshape(B * R, K), w_kd, b_value,
                        t2d=t_b.reshape(B * R, K))
    return out.reshape(B, R, d_model)


if __name__ == "__main__":
    key = jax.random.PRNGKey(0)
    k_w, k_b, k_x, k_x2, k_mark = jax.random.split(key, 5)

    B, L, c_in, d_model = 2, 8, 16, 128

    # value_embedding = nn.Linear(c_in, d_model) parameters (torch layout)
    w_value = 0.1 * jax.random.normal(k_w, (d_model, c_in), dtype=jnp.float32)
    b_value = 0.01 * jax.random.normal(k_b, (d_model,), dtype=jnp.float32)

    # ---- branch 1: x_mark is None -> value_embedding(x) ----
    x = jax.random.normal(k_x, (B, L, c_in), dtype=jnp.float32)
    out1 = jax.block_until_ready(data_embedding_inverted(x, w_value, b_value))
    ref1 = jnp.einsum("blk,dk->bld", x, w_value) + b_value
    assert out1.shape == (B, L, d_model), out1.shape
    assert jnp.allclose(out1, ref1, atol=2e-2, rtol=2e-2)

    # ---- branch 2: with x_mark -> value_embedding(x + temporal.permute(0,2,1)) ----
    # PyTorch broadcasting requires x of shape (B, d_model, L) with c_in == L here.
    x2 = jax.random.normal(k_x2, (B, d_model, c_in), dtype=jnp.float32)
    x_mark = jax.random.randint(k_mark, (B, c_in, 4), 0, 7).astype(jnp.float32)
    out2 = jax.block_until_ready(
        data_embedding_inverted(x2, w_value, b_value, x_mark=x_mark))
    t_ref = jnp.transpose(_temporal_embedding_fixed(x_mark, d_model), (0, 2, 1))
    ref2 = jnp.einsum("brk,dk->brd", x2 + t_ref, w_value) + b_value
    assert out2.shape == (B, d_model, d_model), out2.shape
    assert jnp.allclose(out2, ref2, atol=2e-2, rtol=2e-2)

    print("KERNEL_OK")
</pallas_src>

<mosaic_0001>
module attributes {stable_mosaic.version = 11 : i64} {
  func.func @_linear_kernel(%arg0: i32, %arg1: memref<16x16xf32, #tpu.memory_space<vmem>>, %arg2: memref<16x128xf32, #tpu.memory_space<vmem>>, %arg3: memref<1x128xf32, #tpu.memory_space<vmem>>, %arg4: memref<16x128xf32, #tpu.memory_space<vmem>>) attributes {dimension_semantics = [#tpu.dimension_semantics<parallel>], iteration_bounds = array<i64: 1>, scalar_prefetch = 0 : i64, scratch_operands = 0 : i64, tpu.core_type = #tpu.core_type<tc>, window_params = [{transform_indices = @transform_0, window_bounds = array<i64: 16, 16>}, {pipeline_mode = #tpu.pipeline_mode<synchronous>, transform_indices = @transform_1, window_bounds = array<i64: 16, 128>}, {pipeline_mode = #tpu.pipeline_mode<synchronous>, transform_indices = @transform_2, window_bounds = array<i64: 1, 128>}, {transform_indices = @transform_3, window_bounds = array<i64: 16, 128>}]} {
    %c0 = arith.constant 0 : index
    %c0_0 = arith.constant 0 : index
    %0 = vector.load %arg1[%c0, %c0_0] : memref<16x16xf32, #tpu.memory_space<vmem>>, vector<16x16xf32>
    %c0_1 = arith.constant 0 : index
    %c0_2 = arith.constant 0 : index
    %1 = vector.load %arg2[%c0_1, %c0_2] : memref<16x128xf32, #tpu.memory_space<vmem>>, vector<16x128xf32>
    %cst = arith.constant dense<0.000000e+00> : vector<16x128xf32>
    %2 = tpu.matmul %0, %1, %cst {dimension_numbers = #tpu.dot_dimension_numbers<[1], [0], [0], [1], [0, 0, 1, 1], [], []>} : vector<16x16xf32>, vector<16x128xf32>, vector<16x128xf32> -> vector<16x128xf32>
    %c0_3 = arith.constant 0 : index
    %c0_4 = arith.constant 0 : index
    %3 = vector.load %arg3[%c0_3, %c0_4] : memref<1x128xf32, #tpu.memory_space<vmem>>, vector<1x128xf32>
    %4 = vector.broadcast %3 : vector<1x128xf32> to vector<16x128xf32>
    %5 = arith.addf %2, %4 : vector<16x128xf32>
    %c0_5 = arith.constant 0 : index
    %c0_6 = arith.constant 0 : index
    %6 = vector.load %arg4[%c0_5, %c0_6] : memref<16x128xf32, #tpu.memory_space<vmem>>, vector<16x128xf32>
    tpu.vector_store %arg4[%c0_5, %c0_6], %5 {strides = array<i32>} : memref<16x128xf32, #tpu.memory_space<vmem>>, vector<16x128xf32>,
    return
  }
  func.func @transform_0(%arg0: i32) -> (i32, i32) {
    %c0_i32 = arith.constant 0 : i32
    %c0_i32_0 = arith.constant 0 : i32
    return %arg0, %c0_i32 : i32, i32
  }
  func.func @transform_1(%arg0: i32) -> (i32, i32) {
    %c0_i32 = arith.constant 0 : i32
    %c0_i32_0 = arith.constant 0 : i32
    %c0_i32_1 = arith.constant 0 : i32
    return %c0_i32, %c0_i32_0 : i32, i32
  }
  func.func @transform_2(%arg0: i32) -> (i32, i32) {
    %c0_i32 = arith.constant 0 : i32
    %c0_i32_0 = arith.constant 0 : i32
    %c0_i32_1 = arith.constant 0 : i32
    return %c0_i32, %c0_i32_0 : i32, i32
  }
  func.func @transform_3(%arg0: i32) -> (i32, i32) {
    %c0_i32 = arith.constant 0 : i32
    %c0_i32_0 = arith.constant 0 : i32
    return %arg0, %c0_i32 : i32, i32
  }
}

</mosaic_0001>

<llo_original>
// kernel: tpu_custom_call.1
$region0: #{tpu_custom_call.1}
  #allocation0 [shape = 'u32[]', space=smem, size = 0x4, offset = 0x4, fixed_abs, tag = 'smem constant byte address 0x4 - core index']
  #allocation1 [shape = 'u32[144,128]{1,0:T(1,128)}', space=vmem, size = 0x12000, scoped, tag = 'internal scratch']
  %s0 = inlined_call_operand.hbm [shape: f32[16,16], index: 0, kind: input, shape index: {}]
  %s1 = inlined_call_operand.hbm [shape: f32[16,128], index: 1, kind: input, shape index: {}]
  %s2 = inlined_call_operand.vmem [shape: f32[1,128], index: 2, kind: input, shape index: {}]
  %s3 = inlined_call_operand.hbm [shape: f32[16,128], index: 3, kind: output, shape index: {}]
  %s4 = sld [smem:[#allocation0]]
  $region30: #{tpu_custom_call.1} parent=0
    _
  %s6 = ssub.s32 1, %s4
  %s7 = scalar_select 0, %s6, %s4
  $region1: #{tpu_custom_call.1} parent=0
    #allocation2 [shape = 'u8[8192]{0}', space=vmem, size = 0x2000, scoped, tag = 'input window, operand 0, single buffered']
    #allocation3 [shape = 's32[1]{0}', space=sflag, size = 0x4, scoped, tag = 'scoped memory for tpu_custom_call.1']
    #allocation4 [shape = 's32[1]{0}', space=sflag, size = 0x4, scoped, tag = 'scoped memory for tpu_custom_call.1']
    #allocation5 [shape = 'u8[8192]{0}', space=vmem, size = 0x2000, scoped, tag = 'input window, operand 1, single buffered']
    #allocation6 [shape = 's32[1]{0}', space=sflag, size = 0x4, scoped, tag = 'scoped memory for tpu_custom_call.1']
    #allocation7 [shape = 'u8[8192]{0}', space=vmem, size = 0x2000, scoped, tag = 'output window, operand 0, single buffered']
    %8 = vsyncpa [#allocation3], 0
    %9 = vsyncpa [#allocation6], 0
    %10 = vsyncpa [#allocation4], 0
    // Predicated region
    $region2: #{tpu_custom_call.1} parent=1 // pred_check
      _
    $region3: #{tpu_custom_call.1} parent=1 // pred_check_branch
      %12 = sbr.rel (0) target = $region5
    $region4: #{tpu_custom_call.1} parent=1 // pred_region
      %s14 = ssub.s32 256, 256
      %15 = vsyncadd [#allocation3], %s14
      %s16 = sshll.u32 [#allocation2], 4
      %s17 = int_to_ptr.vmem [resolvable:$true] %s16
      %22 = dma.hbm_to_vmem [thread:$0]  %s0, 256, %s17, [#allocation3], 128, 128, 8
    $region5: #{tpu_custom_call.1} parent=1 // pred_fallthru
      _
    // Predicated region
    $region6: #{tpu_custom_call.1} parent=1 // pred_check
      _
    $region7: #{tpu_custom_call.1} parent=1 // pred_check_branch
      %24 = sbr.rel (0) target = $region9
    $region8: #{tpu_custom_call.1} parent=1 // pred_region
      %s26 = ssub.s32 256, 256
      %27 = vsyncadd [#allocation6], %s26
      %s28 = sshll.u32 [#allocation5], 4
      %s29 = int_to_ptr.vmem [resolvable:$true] %s28
      %34 = dma.hbm_to_vmem [thread:$0]  %s1, 256, %s29, [#allocation6], 128, 128, 8
    $region9: #{tpu_custom_call.1} parent=1 // pred_fallthru
      _
    // Predicated region
    $region10: #{tpu_custom_call.1} parent=1 // pred_check
      _
    $region11: #{tpu_custom_call.1} parent=1 // pred_check_branch
      %36 = sbr.rel (0) target = $region13
    $region12: #{tpu_custom_call.1} parent=1 // pred_region
      _
    $region13: #{tpu_custom_call.1} parent=1 // pred_fallthru
      _
    // Predicated region
    $region14: #{tpu_custom_call.1} parent=1 // pred_check
      _
    $region15: #{tpu_custom_call.1} parent=1 // pred_check_branch
      %38 = sbr.rel (0) target = $region17
    $region16: #{tpu_custom_call.1} parent=1 // pred_region
      %39 = dma.done [#allocation3], 256
    $region17: #{tpu_custom_call.1} parent=1 // pred_fallthru
      _
    // Predicated region
    $region18: #{tpu_custom_call.1} parent=1 // pred_check
      _
    $region19: #{tpu_custom_call.1} parent=1 // pred_check_branch
      %41 = sbr.rel (0) target = $region21
    $region20: #{tpu_custom_call.1} parent=1 // pred_region
      %42 = dma.done [#allocation6], 256
    $region21: #{tpu_custom_call.1} parent=1 // pred_fallthru
      _
    %v43 = vld [vmem:[#allocation2] sm:$0xff]
    %v44 = vld [vmem:[#allocation2 + $0x8] sm:$0xff]
    %v45 = vld [vmem:[#allocation5] sm:$0xff]
    %v46 = vld [vmem:[#allocation5 + $0x8] sm:$0xff]
    %v47 = vld [vmem:[%s2] sm:$0x1]
    %v49 = vlaneseq
    %v50 = vshrl.u32 %v49, 7
    %v51 = vsub.s32 0, %v50
    %v52 = vrot.slane %v47, %v51
    %vm54 = vcmask 130048
    %v56 = vsel %vm54, %v43, 0
    %v59 = vsel %vm54, %v44, 0
    %61 = vmatprep.subr.mxu0 0.0
    %62 = vmatpush1.msra.mxu0 0.0
    %63 = vmatprep.subr.mxu0 0.0
    %64 = vmatpush1.msra.mxu0 0.0
    %65 = vmatprep.subr.mxu0 0.0
    %66 = vmatpush1.msra.mxu0 0.0
    %67 = vmatprep.subr.mxu0 0.0
    %68 = vmatpush1.msra.mxu0 0.0
    %69 = vmatprep.subr.mxu0 0.0
    %70 = vmatpush1.msra.mxu0 0.0
    %71 = vmatprep.subr.mxu0 0.0
    %72 = vmatpush1.msra.mxu0 0.0
    %73 = vmatprep.subr.mxu0 0.0
    %74 = vmatpush1.msra.mxu0 0.0
    %75 = vmatprep.subr.mxu0 0.0
    %76 = vmatpush1.msra.mxu0 0.0
    %77 = vmatprep.subr.mxu0 0.0
    %78 = vmatpush1.msra.mxu0 0.0
    %79 = vmatprep.subr.mxu0 0.0
    %80 = vmatpush1.msra.mxu0 0.0
    %81 = vmatprep.subr.mxu0 0.0
    %82 = vmatpush1.msra.mxu0 0.0
    %83 = vmatprep.subr.mxu0 0.0
    %84 = vmatpush1.msra.mxu0 0.0
    %85 = vmatprep.subr.mxu0 0.0
    %86 = vmatpush1.msra.mxu0 0.0
    %87 = vmatprep.subr.mxu0 0.0
    %88 = vmatpush1.msra.mxu0 0.0
    %89 = vmatprep.subr.mxu0 0.0
    %90 = vmatpush1.msra.mxu0 %v46
    %91 = vmatprep.subr.mxu0 0.0
    %92 = vmatpush1.msra.mxu0 %v45
    %93 = vmatprep.subr.mxu0 0.0
    %94 = vmatpush2.msra.mxu0 0.0
    %95 = vmatprep.subr.mxu0 0.0
    %96 = vmatpush2.msra.mxu0 0.0
    %97 = vmatprep.subr.mxu0 0.0
    %98 = vmatpush2.msra.mxu0 0.0
    %99 = vmatprep.subr.mxu0 0.0
    %100 = vmatpush2.msra.mxu0 0.0
    %101 = vmatprep.subr.mxu0 0.0
    %102 = vmatpush2.msra.mxu0 0.0
    %103 = vmatprep.subr.mxu0 0.0
    %104 = vmatpush2.msra.mxu0 0.0
    %105 = vmatprep.subr.mxu0 0.0
    %106 = vmatpush2.msra.mxu0 0.0
    %107 = vmatprep.subr.mxu0 0.0
    %108 = vmatpush2.msra.mxu0 0.0
    %109 = vmatprep.subr.mxu0 0.0
    %110 = vmatpush2.msra.mxu0 0.0
    %111 = vmatprep.subr.mxu0 0.0
    %112 = vmatpush2.msra.mxu0 0.0
    %113 = vmatprep.subr.mxu0 0.0
    %114 = vmatpush2.msra.mxu0 0.0
    %115 = vmatprep.subr.mxu0 0.0
    %116 = vmatpush2.msra.mxu0 0.0
    %117 = vmatprep.subr.mxu0 0.0
    %118 = vmatpush2.msra.mxu0 0.0
    %119 = vmatprep.subr.mxu0 0.0
    %120 = vmatpush2.msra.mxu0 0.0
    %121 = vmatprep.subr.mxu0 0.0
    %122 = vmatpush2.msra.mxu0 0.0
    %123 = vmatprep.subr.mxu0 0.0
    %124 = vmatpush2.msra.mxu0 0.0
    %125 = vmatprep.mubr.f32.mxu0 0.0
    %126 = vmatmul.mubr.f32.gmra.mxu0 %v56
    %v127 = vpop.f32.mrf.mxu0
    %v128 = vadd.f32 %v52, %v127
    %v129 = vpop.f32.mrf.mxu0
    %130 = vmatprep.mubr.f32.mxu0 0.0
    %131 = vmatmul.mubr.f32.gmra.mxu0 %v59
    %v132 = vpop.f32.mrf.mxu0
    %v133 = vadd.f32 %v52, %v132
    %v134 = vpop.f32.mrf.mxu0
    %135 = vdwg.mxu0
    %136 = vst [vmem:[#allocation7] sm:$0xff] %v128
    %137 = vst [vmem:[#allocation7 + $0x8] sm:$0xff] %v133
    // Predicated region
    $region22: #{tpu_custom_call.1} parent=1 // pred_check
      _
    $region23: #{tpu_custom_call.1} parent=1 // pred_check_branch
      %139 = sbr.rel (0) target = $region25
    $region24: #{tpu_custom_call.1} parent=1 // pred_region
      %s141 = ssub.s32 256, 256
      %142 = vsyncadd [#allocation4], %s141
      %s143 = sshll.u32 [#allocation7], 4
      %s144 = int_to_ptr.vmem [resolvable:$true] %s143
      %149 = dma.vmem_to_hbm [thread:$0]  %s144, 256, %s3, [#allocation4], 128, 128, 8
    $region25: #{tpu_custom_call.1} parent=1 // pred_fallthru
      _
    // Predicated region
    $region26: #{tpu_custom_call.1} parent=1 // pred_check
      _
    $region27: #{tpu_custom_call.1} parent=1 // pred_check_branch
      %151 = sbr.rel (0) target = $region29
    $region28: #{tpu_custom_call.1} parent=1 // pred_region
      %152 = dma.done [#allocation4], 256
    $region29: #{tpu_custom_call.1} parent=1 // pred_fallthru
      _
    %153 = vsyncpa [#allocation3], 1
    %154 = vsyncpa [#allocation6], 1
    %155 = vsyncpa [#allocation4], 1

</llo_original>
